<compile_context>
chip_gen: v7x
topology: tpu7x:2x2x1
jax: 0.10.0
libtpu: 0.0.40
codegen_flags: <defaults>
</compile_context>

<pallas_src>
import functools

import jax
import jax.numpy as jnp
from jax.experimental import pallas as pl
from jax.experimental.pallas import tpu as pltpu


def _vmem_table_kernel(idx_ref, emb_ref, out_ref, *, tile_b, seq_len):
    """Gather-sum with the full embedding table resident in VMEM.

    idx_ref : SMEM [b_pad*S] int32   (scalar-prefetched, flattened indices)
    emb_ref : VMEM [V, D]            (full table, fetched once)
    out_ref : VMEM [tile_b, D]       (output block for this batch tile)
    """
    bt = pl.program_id(0)
    base = bt * (tile_b * seq_len)
    d = emb_ref.shape[1]
    # NOTE: fully unrolled; for very long sequences chunk this with
    # lax.fori_loop to keep code size / scalar-issue pressure bounded.
    rows = []
    for r in range(tile_b):
        acc = jnp.zeros((1, d), jnp.float32)
        for s in range(seq_len):
            tok = idx_ref[base + r * seq_len + s]
            acc = acc + emb_ref[pl.ds(tok, 1), :].astype(jnp.float32)
        rows.append(acc)
    # Single unmasked (tile_b, D) store.
    out_ref[...] = jnp.concatenate(rows, axis=0).astype(out_ref.dtype)


def _hbm_gather_kernel(idx_ref, emb_hbm, out_ref, buf, sem, *, tile_b, seq_len):
    """Gather-sum with the table in HBM and a deep DMA gather pipeline.

    idx_ref : SMEM [b_pad*S] int32
    emb_hbm : HBM  [V, D]            (raw ref; rows gathered via DMA)
    out_ref : VMEM [tile_b, D]
    buf     : VMEM [tile_b, S, D]    (all gathered rows for this tile)
    sem     : DMA semaphores [tile_b, S]
    """
    bt = pl.program_id(0)
    base = bt * (tile_b * seq_len)

    # Issue ALL tile_b*S row gathers up front: each copy is only D*itemsize
    # bytes, so the kernel is DMA-latency bound unless many copies are in
    # flight at once.
    copies = []
    for r in range(tile_b):
        for s in range(seq_len):
            tok = idx_ref[base + r * seq_len + s]
            cp = pltpu.make_async_copy(
                emb_hbm.at[pl.ds(tok, 1), :],
                buf.at[r, pl.ds(s, 1), :],
                sem.at[r, s],
            )
            cp.start()
            copies.append(cp)
    # Wait on the exact descriptors we started (no dummy-descriptor waits).
    for cp in copies:
        cp.wait()

    # One bulk f32 upconvert + reduce, one unmasked (tile_b, D) store.
    rows = buf[...].astype(jnp.float32)          # (tile_b, S, D)
    out_ref[...] = jnp.sum(rows, axis=1).astype(out_ref.dtype)


def _pick_tile_b(batch, seq_len, use_vmem_table):
    # Sublane-aligned (multiple of 8), large enough to amortize per-step
    # overhead, but keep the grid at >= 2 steps when the batch allows so
    # v7x's two TensorCores both get work.
    half = (batch + 1) // 2
    tb = ((half + 7) // 8) * 8
    tb = max(8, min(tb, 128))
    if not use_vmem_table:
        # Bound the fully unrolled DMA-issue loop / DMA-semaphore count.
        tb = min(tb, max(8, ((256 // max(seq_len, 1)) // 8) * 8))
    return tb


def wordvec_avg_forward(x_idx, emb_table, *, tile_b=None,
                        vmem_table_budget_bytes=8 << 20,
                        force_hbm_gather=False):
    """Forward of WordVecAvg: sum of embedding rows over the sequence axis.

    x_idx:     [B, S] integer token indices (assumed in [0, V)).
    emb_table: [V, D] embedding weights (f32 or bf16).
    Returns    [B, D] in emb_table.dtype.
    """
    B, S = x_idx.shape
    V, D = emb_table.shape
    itemsize = jnp.dtype(emb_table.dtype).itemsize

    use_vmem_table = (not force_hbm_gather) and (
        V * D * itemsize <= vmem_table_budget_bytes)
    if tile_b is None:
        tile_b = _pick_tile_b(B, S, use_vmem_table)

    n_tiles = pl.cdiv(B, tile_b)
    b_pad = n_tiles * tile_b

    x_idx = x_idx.astype(jnp.int32)
    if b_pad != B:
        # Padded rows look up token 0 and are sliced off afterwards.
        x_idx = jnp.pad(x_idx, ((0, b_pad - B), (0, 0)))
    x_flat = x_idx.reshape(-1)        # 1-D int32 -> SMEM-friendly prefetch

    flops = b_pad * S * D
    if use_vmem_table:
        bytes_accessed = (V * D * itemsize          # table, streamed once
                          + b_pad * S * 4           # indices
                          + b_pad * D * itemsize)   # output
        kernel = functools.partial(_vmem_table_kernel, tile_b=tile_b, seq_len=S)
        in_specs = [
            # Full-extent block, constant index -> fetched into VMEM once and
            # kept resident across all grid steps.
            pl.BlockSpec((V, D), lambda bt, idx: (0, 0),
                         memory_space=pltpu.MemorySpace.VMEM),
        ]
        scratch_shapes = []
    else:
        bytes_accessed = (b_pad * S * 4                    # indices
                          + b_pad * S * D * itemsize       # gathered rows
                          + b_pad * D * itemsize)          # output
        kernel = functools.partial(_hbm_gather_kernel, tile_b=tile_b, seq_len=S)
        in_specs = [pl.BlockSpec(memory_space=pl.ANY)]     # table stays in HBM
        scratch_shapes = [
            pltpu.VMEM((tile_b, S, D), emb_table.dtype),   # all rows for a tile
            pltpu.SemaphoreType.DMA((tile_b, S)),
        ]

    out = pl.pallas_call(
        kernel,
        out_shape=jax.ShapeDtypeStruct((b_pad, D), emb_table.dtype),
        grid_spec=pltpu.PrefetchScalarGridSpec(
            num_scalar_prefetch=1,                         # x_flat -> SMEM
            grid=(n_tiles,),
            in_specs=in_specs,
            out_specs=pl.BlockSpec((tile_b, D), lambda bt, idx: (bt, 0)),
            scratch_shapes=scratch_shapes,
        ),
        compiler_params=pltpu.CompilerParams(
            dimension_semantics=("parallel",),             # megacore over batch tiles
        ),
        cost_estimate=pl.CostEstimate(
            flops=flops, transcendentals=0, bytes_accessed=bytes_accessed),
    )(x_flat, emb_table)

    return out[:B]


if __name__ == "__main__":
    # Small, deterministic setup consistent with nn.Embedding(V, D, padding_idx=0).
    B, S = 16, 8        # batch, sequence length
    V, D = 1024, 128    # vocab size, embedding dim (D=128 -> lane-dense output)

    key = jax.random.PRNGKey(0)
    k_emb, k_idx = jax.random.split(key)

    # Deterministic "random_init" embedding; padding_idx=0 row zeroed to match
    # nn.Embedding(padding_idx=0) initialization.
    emb = jax.random.normal(k_emb, (V, D), dtype=jnp.float32)
    emb = emb.at[0].set(0.0)

    # Integer token indices.
    x = jax.random.randint(k_idx, (B, S), 0, V, dtype=jnp.int32)

    # Pure-JAX reference: embedding lookup then sum over the sequence axis.
    ref = jnp.take(emb, x, axis=0).sum(axis=1)

    # Path 1: table resident in VMEM (taken automatically for this table size).
    out_fast = jax.block_until_ready(wordvec_avg_forward(x, emb))
    assert out_fast.shape == (B, D), out_fast.shape
    assert jnp.allclose(out_fast, ref, rtol=1e-5, atol=1e-5), "VMEM path mismatch"

    # Path 2: large-vocab HBM gather with a deep DMA pipeline (forced here so
    # both code paths are exercised).
    out_gather = jax.block_until_ready(
        wordvec_avg_forward(x, emb, force_hbm_gather=True))
    assert out_gather.shape == (B, D), out_gather.shape
    assert jnp.allclose(out_gather, ref, rtol=1e-5, atol=1e-5), "HBM path mismatch"

    print("KERNEL_OK")
</pallas_src>

<mosaic_0001>
module attributes {stable_mosaic.version = 11 : i64} {
  func.func @_vmem_table_kernel(%arg0: i32, %arg1: memref<128xi32, #tpu.memory_space<smem>>, %arg2: memref<1024x128xf32, #tpu.memory_space<vmem>>, %arg3: memref<8x128xf32, #tpu.memory_space<vmem>>) attributes {dimension_semantics = [#tpu.dimension_semantics<parallel>], iteration_bounds = array<i64: 2>, scalar_prefetch = 1 : i64, scratch_operands = 0 : i64, tpu.core_type = #tpu.core_type<tc>, window_params = [{pipeline_mode = #tpu.pipeline_mode<synchronous>, transform_indices = @transform_0, window_bounds = array<i64: 1024, 128>}, {transform_indices = @transform_1, window_bounds = array<i64: 8, 128>}]} {
    %c64_i32 = arith.constant 64 : i32
    %0 = arith.muli %arg0, %c64_i32 : i32
    %cst = arith.constant 0.000000e+00 : f32
    %1 = vector.broadcast %cst : f32 to vector<1x128xf32>
    %c0_i32 = arith.constant 0 : i32
    %2 = arith.addi %0, %c0_i32 : i32
    %c0_i32_0 = arith.constant 0 : i32
    %3 = arith.addi %2, %c0_i32_0 : i32
    %4 = arith.index_cast %3 : i32 to index
    %5 = memref.load %arg1[%4] : memref<128xi32, #tpu.memory_space<smem>>
    %6 = arith.index_cast %5 : i32 to index
    %c0 = arith.constant 0 : index
    %7 = vector.load %arg2[%6, %c0] : memref<1024x128xf32, #tpu.memory_space<vmem>>, vector<1x128xf32>
    %8 = arith.addf %1, %7 : vector<1x128xf32>
    %c0_i32_1 = arith.constant 0 : i32
    %9 = arith.addi %0, %c0_i32_1 : i32
    %c1_i32 = arith.constant 1 : i32
    %10 = arith.addi %9, %c1_i32 : i32
    %11 = arith.index_cast %10 : i32 to index
    %12 = memref.load %arg1[%11] : memref<128xi32, #tpu.memory_space<smem>>
    %13 = arith.index_cast %12 : i32 to index
    %c0_2 = arith.constant 0 : index
    %14 = vector.load %arg2[%13, %c0_2] : memref<1024x128xf32, #tpu.memory_space<vmem>>, vector<1x128xf32>
    %15 = arith.addf %8, %14 : vector<1x128xf32>
    %c0_i32_3 = arith.constant 0 : i32
    %16 = arith.addi %0, %c0_i32_3 : i32
    %c2_i32 = arith.constant 2 : i32
    %17 = arith.addi %16, %c2_i32 : i32
    %18 = arith.index_cast %17 : i32 to index
    %19 = memref.load %arg1[%18] : memref<128xi32, #tpu.memory_space<smem>>
    %20 = arith.index_cast %19 : i32 to index
    %c0_4 = arith.constant 0 : index
    %21 = vector.load %arg2[%20, %c0_4] : memref<1024x128xf32, #tpu.memory_space<vmem>>, vector<1x128xf32>
    %22 = arith.addf %15, %21 : vector<1x128xf32>
    %c0_i32_5 = arith.constant 0 : i32
    %23 = arith.addi %0, %c0_i32_5 : i32
    %c3_i32 = arith.constant 3 : i32
    %24 = arith.addi %23, %c3_i32 : i32
    %25 = arith.index_cast %24 : i32 to index
    %26 = memref.load %arg1[%25] : memref<128xi32, #tpu.memory_space<smem>>
    %27 = arith.index_cast %26 : i32 to index
    %c0_6 = arith.constant 0 : index
    %28 = vector.load %arg2[%27, %c0_6] : memref<1024x128xf32, #tpu.memory_space<vmem>>, vector<1x128xf32>
    %29 = arith.addf %22, %28 : vector<1x128xf32>
    %c0_i32_7 = arith.constant 0 : i32
    %30 = arith.addi %0, %c0_i32_7 : i32
    %c4_i32 = arith.constant 4 : i32
    %31 = arith.addi %30, %c4_i32 : i32
    %32 = arith.index_cast %31 : i32 to index
    %33 = memref.load %arg1[%32] : memref<128xi32, #tpu.memory_space<smem>>
    %34 = arith.index_cast %33 : i32 to index
    %c0_8 = arith.constant 0 : index
    %35 = vector.load %arg2[%34, %c0_8] : memref<1024x128xf32, #tpu.memory_space<vmem>>, vector<1x128xf32>
    %36 = arith.addf %29, %35 : vector<1x128xf32>
    %c0_i32_9 = arith.constant 0 : i32
    %37 = arith.addi %0, %c0_i32_9 : i32
    %c5_i32 = arith.constant 5 : i32
    %38 = arith.addi %37, %c5_i32 : i32
    %39 = arith.index_cast %38 : i32 to index
    %40 = memref.load %arg1[%39] : memref<128xi32, #tpu.memory_space<smem>>
    %41 = arith.index_cast %40 : i32 to index
    %c0_10 = arith.constant 0 : index
    %42 = vector.load %arg2[%41, %c0_10] : memref<1024x128xf32, #tpu.memory_space<vmem>>, vector<1x128xf32>
    %43 = arith.addf %36, %42 : vector<1x128xf32>
    %c0_i32_11 = arith.constant 0 : i32
    %44 = arith.addi %0, %c0_i32_11 : i32
    %c6_i32 = arith.constant 6 : i32
    %45 = arith.addi %44, %c6_i32 : i32
    %46 = arith.index_cast %45 : i32 to index
    %47 = memref.load %arg1[%46] : memref<128xi32, #tpu.memory_space<smem>>
    %48 = arith.index_cast %47 : i32 to index
    %c0_12 = arith.constant 0 : index
    %49 = vector.load %arg2[%48, %c0_12] : memref<1024x128xf32, #tpu.memory_space<vmem>>, vector<1x128xf32>
    %50 = arith.addf %43, %49 : vector<1x128xf32>
    %c0_i32_13 = arith.constant 0 : i32
    %51 = arith.addi %0, %c0_i32_13 : i32
    %c7_i32 = arith.constant 7 : i32
    %52 = arith.addi %51, %c7_i32 : i32
    %53 = arith.index_cast %52 : i32 to index
    %54 = memref.load %arg1[%53] : memref<128xi32, #tpu.memory_space<smem>>
    %55 = arith.index_cast %54 : i32 to index
    %c0_14 = arith.constant 0 : index
    %56 = vector.load %arg2[%55, %c0_14] : memref<1024x128xf32, #tpu.memory_space<vmem>>, vector<1x128xf32>
    %57 = arith.addf %50, %56 : vector<1x128xf32>
    %cst_15 = arith.constant 0.000000e+00 : f32
    %58 = vector.broadcast %cst_15 : f32 to vector<1x128xf32>
    %c8_i32 = arith.constant 8 : i32
    %59 = arith.addi %0, %c8_i32 : i32
    %c0_i32_16 = arith.constant 0 : i32
    %60 = arith.addi %59, %c0_i32_16 : i32
    %61 = arith.index_cast %60 : i32 to index
    %62 = memref.load %arg1[%61] : memref<128xi32, #tpu.memory_space<smem>>
    %63 = arith.index_cast %62 : i32 to index
    %c0_17 = arith.constant 0 : index
    %64 = vector.load %arg2[%63, %c0_17] : memref<1024x128xf32, #tpu.memory_space<vmem>>, vector<1x128xf32>
    %65 = arith.addf %58, %64 : vector<1x128xf32>
    %c8_i32_18 = arith.constant 8 : i32
    %66 = arith.addi %0, %c8_i32_18 : i32
    %c1_i32_19 = arith.constant 1 : i32
    %67 = arith.addi %66, %c1_i32_19 : i32
    %68 = arith.index_cast %67 : i32 to index
    %69 = memref.load %arg1[%68] : memref<128xi32, #tpu.memory_space<smem>>
    %70 = arith.index_cast %69 : i32 to index
    %c0_20 = arith.constant 0 : index
    %71 = vector.load %arg2[%70, %c0_20] : memref<1024x128xf32, #tpu.memory_space<vmem>>, vector<1x128xf32>
    %72 = arith.addf %65, %71 : vector<1x128xf32>
    %c8_i32_21 = arith.constant 8 : i32
    %73 = arith.addi %0, %c8_i32_21 : i32
    %c2_i32_22 = arith.constant 2 : i32
    %74 = arith.addi %73, %c2_i32_22 : i32
    %75 = arith.index_cast %74 : i32 to index
    %76 = memref.load %arg1[%75] : memref<128xi32, #tpu.memory_space<smem>>
    %77 = arith.index_cast %76 : i32 to index
    %c0_23 = arith.constant 0 : index
    %78 = vector.load %arg2[%77, %c0_23] : memref<1024x128xf32, #tpu.memory_space<vmem>>, vector<1x128xf32>
    %79 = arith.addf %72, %78 : vector<1x128xf32>
    %c8_i32_24 = arith.constant 8 : i32
    %80 = arith.addi %0, %c8_i32_24 : i32
    %c3_i32_25 = arith.constant 3 : i32
    %81 = arith.addi %80, %c3_i32_25 : i32
    %82 = arith.index_cast %81 : i32 to index
    %83 = memref.load %arg1[%82] : memref<128xi32, #tpu.memory_space<smem>>
    %84 = arith.index_cast %83 : i32 to index
    %c0_26 = arith.constant 0 : index
    %85 = vector.load %arg2[%84, %c0_26] : memref<1024x128xf32, #tpu.memory_space<vmem>>, vector<1x128xf32>
    %86 = arith.addf %79, %85 : vector<1x128xf32>
    %c8_i32_27 = arith.constant 8 : i32
    %87 = arith.addi %0, %c8_i32_27 : i32
    %c4_i32_28 = arith.constant 4 : i32
    %88 = arith.addi %87, %c4_i32_28 : i32
    %89 = arith.index_cast %88 : i32 to index
    %90 = memref.load %arg1[%89] : memref<128xi32, #tpu.memory_space<smem>>
    %91 = arith.index_cast %90 : i32 to index
    %c0_29 = arith.constant 0 : index
    %92 = vector.load %arg2[%91, %c0_29] : memref<1024x128xf32, #tpu.memory_space<vmem>>, vector<1x128xf32>
    %93 = arith.addf %86, %92 : vector<1x128xf32>
    %c8_i32_30 = arith.constant 8 : i32
    %94 = arith.addi %0, %c8_i32_30 : i32
    %c5_i32_31 = arith.constant 5 : i32
    %95 = arith.addi %94, %c5_i32_31 : i32
    %96 = arith.index_cast %95 : i32 to index
    %97 = memref.load %arg1[%96] : memref<128xi32, #tpu.memory_space<smem>>
    %98 = arith.index_cast %97 : i32 to index
    %c0_32 = arith.constant 0 : index
    %99 = vector.load %arg2[%98, %c0_32] : memref<1024x128xf32, #tpu.memory_space<vmem>>, vector<1x128xf32>
    %100 = arith.addf %93, %99 : vector<1x128xf32>
    %c8_i32_33 = arith.constant 8 : i32
    %101 = arith.addi %0, %c8_i32_33 : i32
    %c6_i32_34 = arith.constant 6 : i32
    %102 = arith.addi %101, %c6_i32_34 : i32
    %103 = arith.index_cast %102 : i32 to index
    %104 = memref.load %arg1[%103] : memref<128xi32, #tpu.memory_space<smem>>
    %105 = arith.index_cast %104 : i32 to index
    %c0_35 = arith.constant 0 : index
    %106 = vector.load %arg2[%105, %c0_35] : memref<1024x128xf32, #tpu.memory_space<vmem>>, vector<1x128xf32>
    %107 = arith.addf %100, %106 : vector<1x128xf32>
    %c8_i32_36 = arith.constant 8 : i32
    %108 = arith.addi %0, %c8_i32_36 : i32
    %c7_i32_37 = arith.constant 7 : i32
    %109 = arith.addi %108, %c7_i32_37 : i32
    %110 = arith.index_cast %109 : i32 to index
    %111 = memref.load %arg1[%110] : memref<128xi32, #tpu.memory_space<smem>>
    %112 = arith.index_cast %111 : i32 to index
    %c0_38 = arith.constant 0 : index
    %113 = vector.load %arg2[%112, %c0_38] : memref<1024x128xf32, #tpu.memory_space<vmem>>, vector<1x128xf32>
    %114 = arith.addf %107, %113 : vector<1x128xf32>
    %cst_39 = arith.constant 0.000000e+00 : f32
    %115 = vector.broadcast %cst_39 : f32 to vector<1x128xf32>
    %c16_i32 = arith.constant 16 : i32
    %116 = arith.addi %0, %c16_i32 : i32
    %c0_i32_40 = arith.constant 0 : i32
    %117 = arith.addi %116, %c0_i32_40 : i32
    %118 = arith.index_cast %117 : i32 to index
    %119 = memref.load %arg1[%118] : memref<128xi32, #tpu.memory_space<smem>>
    %120 = arith.index_cast %119 : i32 to index
    %c0_41 = arith.constant 0 : index
    %121 = vector.load %arg2[%120, %c0_41] : memref<1024x128xf32, #tpu.memory_space<vmem>>, vector<1x128xf32>
    %122 = arith.addf %115, %121 : vector<1x128xf32>
    %c16_i32_42 = arith.constant 16 : i32
    %123 = arith.addi %0, %c16_i32_42 : i32
    %c1_i32_43 = arith.constant 1 : i32
    %124 = arith.addi %123, %c1_i32_43 : i32
    %125 = arith.index_cast %124 : i32 to index
    %126 = memref.load %arg1[%125] : memref<128xi32, #tpu.memory_space<smem>>
    %127 = arith.index_cast %126 : i32 to index
    %c0_44 = arith.constant 0 : index
    %128 = vector.load %arg2[%127, %c0_44] : memref<1024x128xf32, #tpu.memory_space<vmem>>, vector<1x128xf32>
    %129 = arith.addf %122, %128 : vector<1x128xf32>
    %c16_i32_45 = arith.constant 16 : i32
    %130 = arith.addi %0, %c16_i32_45 : i32
    %c2_i32_46 = arith.constant 2 : i32
    %131 = arith.addi %130, %c2_i32_46 : i32
    %132 = arith.index_cast %131 : i32 to index
    %133 = memref.load %arg1[%132] : memref<128xi32, #tpu.memory_space<smem>>
    %134 = arith.index_cast %133 : i32 to index
    %c0_47 = arith.constant 0 : index
    %135 = vector.load %arg2[%134, %c0_47] : memref<1024x128xf32, #tpu.memory_space<vmem>>, vector<1x128xf32>
    %136 = arith.addf %129, %135 : vector<1x128xf32>
    %c16_i32_48 = arith.constant 16 : i32
    %137 = arith.addi %0, %c16_i32_48 : i32
    %c3_i32_49 = arith.constant 3 : i32
    %138 = arith.addi %137, %c3_i32_49 : i32
    %139 = arith.index_cast %138 : i32 to index
    %140 = memref.load %arg1[%139] : memref<128xi32, #tpu.memory_space<smem>>
    %141 = arith.index_cast %140 : i32 to index
    %c0_50 = arith.constant 0 : index
    %142 = vector.load %arg2[%141, %c0_50] : memref<1024x128xf32, #tpu.memory_space<vmem>>, vector<1x128xf32>
    %143 = arith.addf %136, %142 : vector<1x128xf32>
    %c16_i32_51 = arith.constant 16 : i32
    %144 = arith.addi %0, %c16_i32_51 : i32
    %c4_i32_52 = arith.constant 4 : i32
    %145 = arith.addi %144, %c4_i32_52 : i32
    %146 = arith.index_cast %145 : i32 to index
    %147 = memref.load %arg1[%146] : memref<128xi32, #tpu.memory_space<smem>>
    %148 = arith.index_cast %147 : i32 to index
    %c0_53 = arith.constant 0 : index
    %149 = vector.load %arg2[%148, %c0_53] : memref<1024x128xf32, #tpu.memory_space<vmem>>, vector<1x128xf32>
    %150 = arith.addf %143, %149 : vector<1x128xf32>
    %c16_i32_54 = arith.constant 16 : i32
    %151 = arith.addi %0, %c16_i32_54 : i32
    %c5_i32_55 = arith.constant 5 : i32
    %152 = arith.addi %151, %c5_i32_55 : i32
    %153 = arith.index_cast %152 : i32 to index
    %154 = memref.load %arg1[%153] : memref<128xi32, #tpu.memory_space<smem>>
    %155 = arith.index_cast %154 : i32 to index
    %c0_56 = arith.constant 0 : index
    %156 = vector.load %arg2[%155, %c0_56] : memref<1024x128xf32, #tpu.memory_space<vmem>>, vector<1x128xf32>
    %157 = arith.addf %150, %156 : vector<1x128xf32>
    %c16_i32_57 = arith.constant 16 : i32
    %158 = arith.addi %0, %c16_i32_57 : i32
    %c6_i32_58 = arith.constant 6 : i32
    %159 = arith.addi %158, %c6_i32_58 : i32
    %160 = arith.index_cast %159 : i32 to index
    %161 = memref.load %arg1[%160] : memref<128xi32, #tpu.memory_space<smem>>
    %162 = arith.index_cast %161 : i32 to index
    %c0_59 = arith.constant 0 : index
    %163 = vector.load %arg2[%162, %c0_59] : memref<1024x128xf32, #tpu.memory_space<vmem>>, vector<1x128xf32>
    %164 = arith.addf %157, %163 : vector<1x128xf32>
    %c16_i32_60 = arith.constant 16 : i32
    %165 = arith.addi %0, %c16_i32_60 : i32
    %c7_i32_61 = arith.constant 7 : i32
    %166 = arith.addi %165, %c7_i32_61 : i32
    %167 = arith.index_cast %166 : i32 to index
    %168 = memref.load %arg1[%167] : memref<128xi32, #tpu.memory_space<smem>>
    %169 = arith.index_cast %168 : i32 to index
    %c0_62 = arith.constant 0 : index
    %170 = vector.load %arg2[%169, %c0_62] : memref<1024x128xf32, #tpu.memory_space<vmem>>, vector<1x128xf32>
    %171 = arith.addf %164, %170 : vector<1x128xf32>
    %cst_63 = arith.constant 0.000000e+00 : f32
    %172 = vector.broadcast %cst_63 : f32 to vector<1x128xf32>
    %c24_i32 = arith.constant 24 : i32
    %173 = arith.addi %0, %c24_i32 : i32
    %c0_i32_64 = arith.constant 0 : i32
    %174 = arith.addi %173, %c0_i32_64 : i32
    %175 = arith.index_cast %174 : i32 to index
    %176 = memref.load %arg1[%175] : memref<128xi32, #tpu.memory_space<smem>>
    %177 = arith.index_cast %176 : i32 to index
    %c0_65 = arith.constant 0 : index
    %178 = vector.load %arg2[%177, %c0_65] : memref<1024x128xf32, #tpu.memory_space<vmem>>, vector<1x128xf32>
    %179 = arith.addf %172, %178 : vector<1x128xf32>
    %c24_i32_66 = arith.constant 24 : i32
    %180 = arith.addi %0, %c24_i32_66 : i32
    %c1_i32_67 = arith.constant 1 : i32
    %181 = arith.addi %180, %c1_i32_67 : i32
    %182 = arith.index_cast %181 : i32 to index
    %183 = memref.load %arg1[%182] : memref<128xi32, #tpu.memory_space<smem>>
    %184 = arith.index_cast %183 : i32 to index
    %c0_68 = arith.constant 0 : index
    %185 = vector.load %arg2[%184, %c0_68] : memref<1024x128xf32, #tpu.memory_space<vmem>>, vector<1x128xf32>
    %186 = arith.addf %179, %185 : vector<1x128xf32>
    %c24_i32_69 = arith.constant 24 : i32
    %187 = arith.addi %0, %c24_i32_69 : i32
    %c2_i32_70 = arith.constant 2 : i32
    %188 = arith.addi %187, %c2_i32_70 : i32
    %189 = arith.index_cast %188 : i32 to index
    %190 = memref.load %arg1[%189] : memref<128xi32, #tpu.memory_space<smem>>
    %191 = arith.index_cast %190 : i32 to index
    %c0_71 = arith.constant 0 : index
    %192 = vector.load %arg2[%191, %c0_71] : memref<1024x128xf32, #tpu.memory_space<vmem>>, vector<1x128xf32>
    %193 = arith.addf %186, %192 : vector<1x128xf32>
    %c24_i32_72 = arith.constant 24 : i32
    %194 = arith.addi %0, %c24_i32_72 : i32
    %c3_i32_73 = arith.constant 3 : i32
    %195 = arith.addi %194, %c3_i32_73 : i32
    %196 = arith.index_cast %195 : i32 to index
    %197 = memref.load %arg1[%196] : memref<128xi32, #tpu.memory_space<smem>>
    %198 = arith.index_cast %197 : i32 to index
    %c0_74 = arith.constant 0 : index
    %199 = vector.load %arg2[%198, %c0_74] : memref<1024x128xf32, #tpu.memory_space<vmem>>, vector<1x128xf32>
    %200 = arith.addf %193, %199 : vector<1x128xf32>
    %c24_i32_75 = arith.constant 24 : i32
    %201 = arith.addi %0, %c24_i32_75 : i32
    %c4_i32_76 = arith.constant 4 : i32
    %202 = arith.addi %201, %c4_i32_76 : i32
    %203 = arith.index_cast %202 : i32 to index
    %204 = memref.load %arg1[%203] : memref<128xi32, #tpu.memory_space<smem>>
    %205 = arith.index_cast %204 : i32 to index
    %c0_77 = arith.constant 0 : index
    %206 = vector.load %arg2[%205, %c0_77] : memref<1024x128xf32, #tpu.memory_space<vmem>>, vector<1x128xf32>
    %207 = arith.addf %200, %206 : vector<1x128xf32>
    %c24_i32_78 = arith.constant 24 : i32
    %208 = arith.addi %0, %c24_i32_78 : i32
    %c5_i32_79 = arith.constant 5 : i32
    %209 = arith.addi %208, %c5_i32_79 : i32
    %210 = arith.index_cast %209 : i32 to index
    %211 = memref.load %arg1[%210] : memref<128xi32, #tpu.memory_space<smem>>
    %212 = arith.index_cast %211 : i32 to index
    %c0_80 = arith.constant 0 : index
    %213 = vector.load %arg2[%212, %c0_80] : memref<1024x128xf32, #tpu.memory_space<vmem>>, vector<1x128xf32>
    %214 = arith.addf %207, %213 : vector<1x128xf32>
    %c24_i32_81 = arith.constant 24 : i32
    %215 = arith.addi %0, %c24_i32_81 : i32
    %c6_i32_82 = arith.constant 6 : i32
    %216 = arith.addi %215, %c6_i32_82 : i32
    %217 = arith.index_cast %216 : i32 to index
    %218 = memref.load %arg1[%217] : memref<128xi32, #tpu.memory_space<smem>>
    %219 = arith.index_cast %218 : i32 to index
    %c0_83 = arith.constant 0 : index
    %220 = vector.load %arg2[%219, %c0_83] : memref<1024x128xf32, #tpu.memory_space<vmem>>, vector<1x128xf32>
    %221 = arith.addf %214, %220 : vector<1x128xf32>
    %c24_i32_84 = arith.constant 24 : i32
    %222 = arith.addi %0, %c24_i32_84 : i32
    %c7_i32_85 = arith.constant 7 : i32
    %223 = arith.addi %222, %c7_i32_85 : i32
    %224 = arith.index_cast %223 : i32 to index
    %225 = memref.load %arg1[%224] : memref<128xi32, #tpu.memory_space<smem>>
    %226 = arith.index_cast %225 : i32 to index
    %c0_86 = arith.constant 0 : index
    %227 = vector.load %arg2[%226, %c0_86] : memref<1024x128xf32, #tpu.memory_space<vmem>>, vector<1x128xf32>
    %228 = arith.addf %221, %227 : vector<1x128xf32>
    %cst_87 = arith.constant 0.000000e+00 : f32
    %229 = vector.broadcast %cst_87 : f32 to vector<1x128xf32>
    %c32_i32 = arith.constant 32 : i32
    %230 = arith.addi %0, %c32_i32 : i32
    %c0_i32_88 = arith.constant 0 : i32
    %231 = arith.addi %230, %c0_i32_88 : i32
    %232 = arith.index_cast %231 : i32 to index
    %233 = memref.load %arg1[%232] : memref<128xi32, #tpu.memory_space<smem>>
    %234 = arith.index_cast %233 : i32 to index
    %c0_89 = arith.constant 0 : index
    %235 = vector.load %arg2[%234, %c0_89] : memref<1024x128xf32, #tpu.memory_space<vmem>>, vector<1x128xf32>
    %236 = arith.addf %229, %235 : vector<1x128xf32>
    %c32_i32_90 = arith.constant 32 : i32
    %237 = arith.addi %0, %c32_i32_90 : i32
    %c1_i32_91 = arith.constant 1 : i32
    %238 = arith.addi %237, %c1_i32_91 : i32
    %239 = arith.index_cast %238 : i32 to index
    %240 = memref.load %arg1[%239] : memref<128xi32, #tpu.memory_space<smem>>
    %241 = arith.index_cast %240 : i32 to index
    %c0_92 = arith.constant 0 : index
    %242 = vector.load %arg2[%241, %c0_92] : memref<1024x128xf32, #tpu.memory_space<vmem>>, vector<1x128xf32>
    %243 = arith.addf %236, %242 : vector<1x128xf32>
    %c32_i32_93 = arith.constant 32 : i32
    %244 = arith.addi %0, %c32_i32_93 : i32
    %c2_i32_94 = arith.constant 2 : i32
    %245 = arith.addi %244, %c2_i32_94 : i32
    %246 = arith.index_cast %245 : i32 to index
    %247 = memref.load %arg1[%246] : memref<128xi32, #tpu.memory_space<smem>>
    %248 = arith.index_cast %247 : i32 to index
    %c0_95 = arith.constant 0 : index
    %249 = vector.load %arg2[%248, %c0_95] : memref<1024x128xf32, #tpu.memory_space<vmem>>, vector<1x128xf32>
    %250 = arith.addf %243, %249 : vector<1x128xf32>
    %c32_i32_96 = arith.constant 32 : i32
    %251 = arith.addi %0, %c32_i32_96 : i32
    %c3_i32_97 = arith.constant 3 : i32
    %252 = arith.addi %251, %c3_i32_97 : i32
    %253 = arith.index_cast %252 : i32 to index
    %254 = memref.load %arg1[%253] : memref<128xi32, #tpu.memory_space<smem>>
    %255 = arith.index_cast %254 : i32 to index
    %c0_98 = arith.constant 0 : index
    %256 = vector.load %arg2[%255, %c0_98] : memref<1024x128xf32, #tpu.memory_space<vmem>>, vector<1x128xf32>
    %257 = arith.addf %250, %256 : vector<1x128xf32>
    %c32_i32_99 = arith.constant 32 : i32
    %258 = arith.addi %0, %c32_i32_99 : i32
    %c4_i32_100 = arith.constant 4 : i32
    %259 = arith.addi %258, %c4_i32_100 : i32
    %260 = arith.index_cast %259 : i32 to index
    %261 = memref.load %arg1[%260] : memref<128xi32, #tpu.memory_space<smem>>
    %262 = arith.index_cast %261 : i32 to index
    %c0_101 = arith.constant 0 : index
    %263 = vector.load %arg2[%262, %c0_101] : memref<1024x128xf32, #tpu.memory_space<vmem>>, vector<1x128xf32>
    %264 = arith.addf %257, %263 : vector<1x128xf32>
    %c32_i32_102 = arith.constant 32 : i32
    %265 = arith.addi %0, %c32_i32_102 : i32
    %c5_i32_103 = arith.constant 5 : i32
    %266 = arith.addi %265, %c5_i32_103 : i32
    %267 = arith.index_cast %266 : i32 to index
    %268 = memref.load %arg1[%267] : memref<128xi32, #tpu.memory_space<smem>>
    %269 = arith.index_cast %268 : i32 to index
    %c0_104 = arith.constant 0 : index
    %270 = vector.load %arg2[%269, %c0_104] : memref<1024x128xf32, #tpu.memory_space<vmem>>, vector<1x128xf32>
    %271 = arith.addf %264, %270 : vector<1x128xf32>
    %c32_i32_105 = arith.constant 32 : i32
    %272 = arith.addi %0, %c32_i32_105 : i32
    %c6_i32_106 = arith.constant 6 : i32
    %273 = arith.addi %272, %c6_i32_106 : i32
    %274 = arith.index_cast %273 : i32 to index
    %275 = memref.load %arg1[%274] : memref<128xi32, #tpu.memory_space<smem>>
    %276 = arith.index_cast %275 : i32 to index
    %c0_107 = arith.constant 0 : index
    %277 = vector.load %arg2[%276, %c0_107] : memref<1024x128xf32, #tpu.memory_space<vmem>>, vector<1x128xf32>
    %278 = arith.addf %271, %277 : vector<1x128xf32>
    %c32_i32_108 = arith.constant 32 : i32
    %279 = arith.addi %0, %c32_i32_108 : i32
    %c7_i32_109 = arith.constant 7 : i32
    %280 = arith.addi %279, %c7_i32_109 : i32
    %281 = arith.index_cast %280 : i32 to index
    %282 = memref.load %arg1[%281] : memref<128xi32, #tpu.memory_space<smem>>
    %283 = arith.index_cast %282 : i32 to index
    %c0_110 = arith.constant 0 : index
    %284 = vector.load %arg2[%283, %c0_110] : memref<1024x128xf32, #tpu.memory_space<vmem>>, vector<1x128xf32>
    %285 = arith.addf %278, %284 : vector<1x128xf32>
    %cst_111 = arith.constant 0.000000e+00 : f32
    %286 = vector.broadcast %cst_111 : f32 to vector<1x128xf32>
    %c40_i32 = arith.constant 40 : i32
    %287 = arith.addi %0, %c40_i32 : i32
    %c0_i32_112 = arith.constant 0 : i32
    %288 = arith.addi %287, %c0_i32_112 : i32
    %289 = arith.index_cast %288 : i32 to index
    %290 = memref.load %arg1[%289] : memref<128xi32, #tpu.memory_space<smem>>
    %291 = arith.index_cast %290 : i32 to index
    %c0_113 = arith.constant 0 : index
    %292 = vector.load %arg2[%291, %c0_113] : memref<1024x128xf32, #tpu.memory_space<vmem>>, vector<1x128xf32>
    %293 = arith.addf %286, %292 : vector<1x128xf32>
    %c40_i32_114 = arith.constant 40 : i32
    %294 = arith.addi %0, %c40_i32_114 : i32
    %c1_i32_115 = arith.constant 1 : i32
    %295 = arith.addi %294, %c1_i32_115 : i32
    %296 = arith.index_cast %295 : i32 to index
    %297 = memref.load %arg1[%296] : memref<128xi32, #tpu.memory_space<smem>>
    %298 = arith.index_cast %297 : i32 to index
    %c0_116 = arith.constant 0 : index
    %299 = vector.load %arg2[%298, %c0_116] : memref<1024x128xf32, #tpu.memory_space<vmem>>, vector<1x128xf32>
    %300 = arith.addf %293, %299 : vector<1x128xf32>
    %c40_i32_117 = arith.constant 40 : i32
    %301 = arith.addi %0, %c40_i32_117 : i32
    %c2_i32_118 = arith.constant 2 : i32
    %302 = arith.addi %301, %c2_i32_118 : i32
    %303 = arith.index_cast %302 : i32 to index
    %304 = memref.load %arg1[%303] : memref<128xi32, #tpu.memory_space<smem>>
    %305 = arith.index_cast %304 : i32 to index
    %c0_119 = arith.constant 0 : index
    %306 = vector.load %arg2[%305, %c0_119] : memref<1024x128xf32, #tpu.memory_space<vmem>>, vector<1x128xf32>
    %307 = arith.addf %300, %306 : vector<1x128xf32>
    %c40_i32_120 = arith.constant 40 : i32
    %308 = arith.addi %0, %c40_i32_120 : i32
    %c3_i32_121 = arith.constant 3 : i32
    %309 = arith.addi %308, %c3_i32_121 : i32
    %310 = arith.index_cast %309 : i32 to index
    %311 = memref.load %arg1[%310] : memref<128xi32, #tpu.memory_space<smem>>
    %312 = arith.index_cast %311 : i32 to index
    %c0_122 = arith.constant 0 : index
    %313 = vector.load %arg2[%312, %c0_122] : memref<1024x128xf32, #tpu.memory_space<vmem>>, vector<1x128xf32>
    %314 = arith.addf %307, %313 : vector<1x128xf32>
    %c40_i32_123 = arith.constant 40 : i32
    %315 = arith.addi %0, %c40_i32_123 : i32
    %c4_i32_124 = arith.constant 4 : i32
    %316 = arith.addi %315, %c4_i32_124 : i32
    %317 = arith.index_cast %316 : i32 to index
    %318 = memref.load %arg1[%317] : memref<128xi32, #tpu.memory_space<smem>>
    %319 = arith.index_cast %318 : i32 to index
    %c0_125 = arith.constant 0 : index
    %320 = vector.load %arg2[%319, %c0_125] : memref<1024x128xf32, #tpu.memory_space<vmem>>, vector<1x128xf32>
    %321 = arith.addf %314, %320 : vector<1x128xf32>
    %c40_i32_126 = arith.constant 40 : i32
    %322 = arith.addi %0, %c40_i32_126 : i32
    %c5_i32_127 = arith.constant 5 : i32
    %323 = arith.addi %322, %c5_i32_127 : i32
    %324 = arith.index_cast %323 : i32 to index
    %325 = memref.load %arg1[%324] : memref<128xi32, #tpu.memory_space<smem>>
    %326 = arith.index_cast %325 : i32 to index
    %c0_128 = arith.constant 0 : index
    %327 = vector.load %arg2[%326, %c0_128] : memref<1024x128xf32, #tpu.memory_space<vmem>>, vector<1x128xf32>
    %328 = arith.addf %321, %327 : vector<1x128xf32>
    %c40_i32_129 = arith.constant 40 : i32
    %329 = arith.addi %0, %c40_i32_129 : i32
    %c6_i32_130 = arith.constant 6 : i32
    %330 = arith.addi %329, %c6_i32_130 : i32
    %331 = arith.index_cast %330 : i32 to index
    %332 = memref.load %arg1[%331] : memref<128xi32, #tpu.memory_space<smem>>
    %333 = arith.index_cast %332 : i32 to index
    %c0_131 = arith.constant 0 : index
    %334 = vector.load %arg2[%333, %c0_131] : memref<1024x128xf32, #tpu.memory_space<vmem>>, vector<1x128xf32>
    %335 = arith.addf %328, %334 : vector<1x128xf32>
    %c40_i32_132 = arith.constant 40 : i32
    %336 = arith.addi %0, %c40_i32_132 : i32
    %c7_i32_133 = arith.constant 7 : i32
    %337 = arith.addi %336, %c7_i32_133 : i32
    %338 = arith.index_cast %337 : i32 to index
    %339 = memref.load %arg1[%338] : memref<128xi32, #tpu.memory_space<smem>>
    %340 = arith.index_cast %339 : i32 to index
    %c0_134 = arith.constant 0 : index
    %341 = vector.load %arg2[%340, %c0_134] : memref<1024x128xf32, #tpu.memory_space<vmem>>, vector<1x128xf32>
    %342 = arith.addf %335, %341 : vector<1x128xf32>
    %cst_135 = arith.constant 0.000000e+00 : f32
    %343 = vector.broadcast %cst_135 : f32 to vector<1x128xf32>
    %c48_i32 = arith.constant 48 : i32
    %344 = arith.addi %0, %c48_i32 : i32
    %c0_i32_136 = arith.constant 0 : i32
    %345 = arith.addi %344, %c0_i32_136 : i32
    %346 = arith.index_cast %345 : i32 to index
    %347 = memref.load %arg1[%346] : memref<128xi32, #tpu.memory_space<smem>>
    %348 = arith.index_cast %347 : i32 to index
    %c0_137 = arith.constant 0 : index
    %349 = vector.load %arg2[%348, %c0_137] : memref<1024x128xf32, #tpu.memory_space<vmem>>, vector<1x128xf32>
    %350 = arith.addf %343, %349 : vector<1x128xf32>
    %c48_i32_138 = arith.constant 48 : i32
    %351 = arith.addi %0, %c48_i32_138 : i32
    %c1_i32_139 = arith.constant 1 : i32
    %352 = arith.addi %351, %c1_i32_139 : i32
    %353 = arith.index_cast %352 : i32 to index
    %354 = memref.load %arg1[%353] : memref<128xi32, #tpu.memory_space<smem>>
    %355 = arith.index_cast %354 : i32 to index
    %c0_140 = arith.constant 0 : index
    %356 = vector.load %arg2[%355, %c0_140] : memref<1024x128xf32, #tpu.memory_space<vmem>>, vector<1x128xf32>
    %357 = arith.addf %350, %356 : vector<1x128xf32>
    %c48_i32_141 = arith.constant 48 : i32
    %358 = arith.addi %0, %c48_i32_141 : i32
    %c2_i32_142 = arith.constant 2 : i32
    %359 = arith.addi %358, %c2_i32_142 : i32
    %360 = arith.index_cast %359 : i32 to index
    %361 = memref.load %arg1[%360] : memref<128xi32, #tpu.memory_space<smem>>
    %362 = arith.index_cast %361 : i32 to index
    %c0_143 = arith.constant 0 : index
    %363 = vector.load %arg2[%362, %c0_143] : memref<1024x128xf32, #tpu.memory_space<vmem>>, vector<1x128xf32>
    %364 = arith.addf %357, %363 : vector<1x128xf32>
    %c48_i32_144 = arith.constant 48 : i32
    %365 = arith.addi %0, %c48_i32_144 : i32
    %c3_i32_145 = arith.constant 3 : i32
    %366 = arith.addi %365, %c3_i32_145 : i32
    %367 = arith.index_cast %366 : i32 to index
    %368 = memref.load %arg1[%367] : memref<128xi32, #tpu.memory_space<smem>>
    %369 = arith.index_cast %368 : i32 to index
    %c0_146 = arith.constant 0 : index
    %370 = vector.load %arg2[%369, %c0_146] : memref<1024x128xf32, #tpu.memory_space<vmem>>, vector<1x128xf32>
    %371 = arith.addf %364, %370 : vector<1x128xf32>
    %c48_i32_147 = arith.constant 48 : i32
    %372 = arith.addi %0, %c48_i32_147 : i32
    %c4_i32_148 = arith.constant 4 : i32
    %373 = arith.addi %372, %c4_i32_148 : i32
    %374 = arith.index_cast %373 : i32 to index
    %375 = memref.load %arg1[%374] : memref<128xi32, #tpu.memory_space<smem>>
    %376 = arith.index_cast %375 : i32 to index
    %c0_149 = arith.constant 0 : index
    %377 = vector.load %arg2[%376, %c0_149] : memref<1024x128xf32, #tpu.memory_space<vmem>>, vector<1x128xf32>
    %378 = arith.addf %371, %377 : vector<1x128xf32>
    %c48_i32_150 = arith.constant 48 : i32
    %379 = arith.addi %0, %c48_i32_150 : i32
    %c5_i32_151 = arith.constant 5 : i32
    %380 = arith.addi %379, %c5_i32_151 : i32
    %381 = arith.index_cast %380 : i32 to index
    %382 = memref.load %arg1[%381] : memref<128xi32, #tpu.memory_space<smem>>
    %383 = arith.index_cast %382 : i32 to index
    %c0_152 = arith.constant 0 : index
    %384 = vector.load %arg2[%383, %c0_152] : memref<1024x128xf32, #tpu.memory_space<vmem>>, vector<1x128xf32>
    %385 = arith.addf %378, %384 : vector<1x128xf32>
    %c48_i32_153 = arith.constant 48 : i32
    %386 = arith.addi %0, %c48_i32_153 : i32
    %c6_i32_154 = arith.constant 6 : i32
    %387 = arith.addi %386, %c6_i32_154 : i32
    %388 = arith.index_cast %387 : i32 to index
    %389 = memref.load %arg1[%388] : memref<128xi32, #tpu.memory_space<smem>>
    %390 = arith.index_cast %389 : i32 to index
    %c0_155 = arith.constant 0 : index
    %391 = vector.load %arg2[%390, %c0_155] : memref<1024x128xf32, #tpu.memory_space<vmem>>, vector<1x128xf32>
    %392 = arith.addf %385, %391 : vector<1x128xf32>
    %c48_i32_156 = arith.constant 48 : i32
    %393 = arith.addi %0, %c48_i32_156 : i32
    %c7_i32_157 = arith.constant 7 : i32
    %394 = arith.addi %393, %c7_i32_157 : i32
    %395 = arith.index_cast %394 : i32 to index
    %396 = memref.load %arg1[%395] : memref<128xi32, #tpu.memory_space<smem>>
    %397 = arith.index_cast %396 : i32 to index
    %c0_158 = arith.constant 0 : index
    %398 = vector.load %arg2[%397, %c0_158] : memref<1024x128xf32, #tpu.memory_space<vmem>>, vector<1x128xf32>
    %399 = arith.addf %392, %398 : vector<1x128xf32>
    %cst_159 = arith.constant 0.000000e+00 : f32
    %400 = vector.broadcast %cst_159 : f32 to vector<1x128xf32>
    %c56_i32 = arith.constant 56 : i32
    %401 = arith.addi %0, %c56_i32 : i32
    %c0_i32_160 = arith.constant 0 : i32
    %402 = arith.addi %401, %c0_i32_160 : i32
    %403 = arith.index_cast %402 : i32 to index
    %404 = memref.load %arg1[%403] : memref<128xi32, #tpu.memory_space<smem>>
    %405 = arith.index_cast %404 : i32 to index
    %c0_161 = arith.constant 0 : index
    %406 = vector.load %arg2[%405, %c0_161] : memref<1024x128xf32, #tpu.memory_space<vmem>>, vector<1x128xf32>
    %407 = arith.addf %400, %406 : vector<1x128xf32>
    %c56_i32_162 = arith.constant 56 : i32
    %408 = arith.addi %0, %c56_i32_162 : i32
    %c1_i32_163 = arith.constant 1 : i32
    %409 = arith.addi %408, %c1_i32_163 : i32
    %410 = arith.index_cast %409 : i32 to index
    %411 = memref.load %arg1[%410] : memref<128xi32, #tpu.memory_space<smem>>
    %412 = arith.index_cast %411 : i32 to index
    %c0_164 = arith.constant 0 : index
    %413 = vector.load %arg2[%412, %c0_164] : memref<1024x128xf32, #tpu.memory_space<vmem>>, vector<1x128xf32>
    %414 = arith.addf %407, %413 : vector<1x128xf32>
    %c56_i32_165 = arith.constant 56 : i32
    %415 = arith.addi %0, %c56_i32_165 : i32
    %c2_i32_166 = arith.constant 2 : i32
    %416 = arith.addi %415, %c2_i32_166 : i32
    %417 = arith.index_cast %416 : i32 to index
    %418 = memref.load %arg1[%417] : memref<128xi32, #tpu.memory_space<smem>>
    %419 = arith.index_cast %418 : i32 to index
    %c0_167 = arith.constant 0 : index
    %420 = vector.load %arg2[%419, %c0_167] : memref<1024x128xf32, #tpu.memory_space<vmem>>, vector<1x128xf32>
    %421 = arith.addf %414, %420 : vector<1x128xf32>
    %c56_i32_168 = arith.constant 56 : i32
    %422 = arith.addi %0, %c56_i32_168 : i32
    %c3_i32_169 = arith.constant 3 : i32
    %423 = arith.addi %422, %c3_i32_169 : i32
    %424 = arith.index_cast %423 : i32 to index
    %425 = memref.load %arg1[%424] : memref<128xi32, #tpu.memory_space<smem>>
    %426 = arith.index_cast %425 : i32 to index
    %c0_170 = arith.constant 0 : index
    %427 = vector.load %arg2[%426, %c0_170] : memref<1024x128xf32, #tpu.memory_space<vmem>>, vector<1x128xf32>
    %428 = arith.addf %421, %427 : vector<1x128xf32>
    %c56_i32_171 = arith.constant 56 : i32
    %429 = arith.addi %0, %c56_i32_171 : i32
    %c4_i32_172 = arith.constant 4 : i32
    %430 = arith.addi %429, %c4_i32_172 : i32
    %431 = arith.index_cast %430 : i32 to index
    %432 = memref.load %arg1[%431] : memref<128xi32, #tpu.memory_space<smem>>
    %433 = arith.index_cast %432 : i32 to index
    %c0_173 = arith.constant 0 : index
    %434 = vector.load %arg2[%433, %c0_173] : memref<1024x128xf32, #tpu.memory_space<vmem>>, vector<1x128xf32>
    %435 = arith.addf %428, %434 : vector<1x128xf32>
    %c56_i32_174 = arith.constant 56 : i32
    %436 = arith.addi %0, %c56_i32_174 : i32
    %c5_i32_175 = arith.constant 5 : i32
    %437 = arith.addi %436, %c5_i32_175 : i32
    %438 = arith.index_cast %437 : i32 to index
    %439 = memref.load %arg1[%438] : memref<128xi32, #tpu.memory_space<smem>>
    %440 = arith.index_cast %439 : i32 to index
    %c0_176 = arith.constant 0 : index
    %441 = vector.load %arg2[%440, %c0_176] : memref<1024x128xf32, #tpu.memory_space<vmem>>, vector<1x128xf32>
    %442 = arith.addf %435, %441 : vector<1x128xf32>
    %c56_i32_177 = arith.constant 56 : i32
    %443 = arith.addi %0, %c56_i32_177 : i32
    %c6_i32_178 = arith.constant 6 : i32
    %444 = arith.addi %443, %c6_i32_178 : i32
    %445 = arith.index_cast %444 : i32 to index
    %446 = memref.load %arg1[%445] : memref<128xi32, #tpu.memory_space<smem>>
    %447 = arith.index_cast %446 : i32 to index
    %c0_179 = arith.constant 0 : index
    %448 = vector.load %arg2[%447, %c0_179] : memref<1024x128xf32, #tpu.memory_space<vmem>>, vector<1x128xf32>
    %449 = arith.addf %442, %448 : vector<1x128xf32>
    %c56_i32_180 = arith.constant 56 : i32
    %450 = arith.addi %0, %c56_i32_180 : i32
    %c7_i32_181 = arith.constant 7 : i32
    %451 = arith.addi %450, %c7_i32_181 : i32
    %452 = arith.index_cast %451 : i32 to index
    %453 = memref.load %arg1[%452] : memref<128xi32, #tpu.memory_space<smem>>
    %454 = arith.index_cast %453 : i32 to index
    %c0_182 = arith.constant 0 : index
    %455 = vector.load %arg2[%454, %c0_182] : memref<1024x128xf32, #tpu.memory_space<vmem>>, vector<1x128xf32>
    %456 = arith.addf %449, %455 : vector<1x128xf32>
    %457 = tpu.concatenate %57, %114, %171, %228, %285, %342, %399, %456 in 0 : vector<1x128xf32>, vector<1x128xf32>, vector<1x128xf32>, vector<1x128xf32>, vector<1x128xf32>, vector<1x128xf32>, vector<1x128xf32>, vector<1x128xf32> -> vector<8x128xf32>
    %c0_183 = arith.constant 0 : index
    %c0_184 = arith.constant 0 : index
    %458 = vector.load %arg3[%c0_183, %c0_184] : memref<8x128xf32, #tpu.memory_space<vmem>>, vector<8x128xf32>
    tpu.vector_store %arg3[%c0_183, %c0_184], %457 {strides = array<i32>} : memref<8x128xf32, #tpu.memory_space<vmem>>, vector<8x128xf32>,
    return
  }
  func.func @transform_0(%arg0: i32, %arg1: memref<128xi32, #tpu.memory_space<smem>>) -> (i32, i32) {
    %c0_i32 = arith.constant 0 : i32
    %c0_i32_0 = arith.constant 0 : i32
    %c0_i32_1 = arith.constant 0 : i32
    return %c0_i32, %c0_i32_0 : i32, i32
  }
  func.func @transform_1(%arg0: i32, %arg1: memref<128xi32, #tpu.memory_space<smem>>) -> (i32, i32) {
    %c0_i32 = arith.constant 0 : i32
    %c0_i32_0 = arith.constant 0 : i32
    return %arg0, %c0_i32 : i32, i32
  }
}

</mosaic_0001>

<llo_original>
// kernel: tpu_custom_call.1
$region0: #{tpu_custom_call.1}
  #allocation0 [shape = 'u32[]', space=smem, size = 0x4, offset = 0x4, fixed_abs, tag = 'smem constant byte address 0x4 - core index']
  #allocation1 [shape = 'u32[144,128]{1,0:T(1,128)}', space=vmem, size = 0x12000, scoped, tag = 'internal scratch']
  #allocation2 [shape = 's32[1]{0}', space=sflag, size = 0x4, scoped, tag = 'scoped memory for tpu_custom_call.1']
  #allocation3 [shape = 'u8[512]{0}', space=smem, size = 0x200, scoped, tag = 'prefetched SMEM operand 0']
  %s0 = inlined_call_operand.hbm [shape: s32[128], index: 0, kind: input, shape index: {}]
  %s1 = inlined_call_operand.hbm [shape: f32[1024,128], index: 1, kind: input, shape index: {}]
  %s2 = inlined_call_operand.hbm [shape: f32[16,128], index: 2, kind: output, shape index: {}]
  %s3 = sld [smem:[#allocation0]]
  $region41: #{tpu_custom_call.1} parent=0
    _
  %s5 = ssub.s32 1, %s3
  %s6 = scalar_select 0, %s5, %s3
  %8 = dma.hbm_to_smem %s0, 16, [#allocation3], [#allocation2]
  %9 = dma.done [#allocation2], 16
  %10 = sfence
  $region1: #{tpu_custom_call.1} parent=0
    #allocation4 [shape = 'u8[524288]{0}', space=vmem, size = 0x80000, scoped, tag = 'input window, operand 1, single buffered']
    #allocation5 [shape = 's32[2]{0}', space=sflag, size = 0x8, scoped, tag = 'scoped memory for tpu_custom_call.1']
    #allocation6 [shape = 's32[2]{0}', space=sflag, size = 0x8, scoped, tag = 'scoped memory for tpu_custom_call.1']
    #allocation7 [shape = 'u8[8192]{0}', space=vmem, size = 0x2000, scoped, tag = 'output window, operand 0']
    %11 = vsyncpa [#allocation5], 0
    %12 = vsyncpa [#allocation6], 0
    %s13 = scalar_lea.sflag [#allocation6], 1
    %14 = vsyncpa %s13, 0
    loop: start=0, step=1, limit=4
    $region2: #{tpu_custom_call.1} parent=1 // loop_pre_header
      _
    $region3: #{tpu_custom_call.1} parent=1 // loop_header
      %s16 = sphi 0, %s20
      %p17 = scmp.ge.s32.totalorder %s16, 4
      %s24 = sphi 0, %s24
      %s26 = sphi 0, %s24
      %s27 = sphi 0, %s26
      %s41 = sphi 0, %s27
      %s47 = sphi 0, %s49
      %s50 = sphi 0, %s47
      %s51 = sphi 0, %s50
      %s67 = sphi 0, %s51
    $region4: #{tpu_custom_call.1} parent=1 // loop_header_branch
      %19 = sbr.rel (%p17) target = $region8
    $region5: #{tpu_custom_call.1} parent=1 // loop_body
      %s21 = ssub.s32 %s16, 1
      %s22 = ssub.s32 %s16, 2
      %s23 = sadd.s32 %s16, 1
      %s25 = sadd.s32 %s24, 1
      %p28 = scmp.eq.s32.totalorder %s16, 1
      %p29 = scmp.ne.s32.totalorder %s24, %s26
      %p30 = scmp.eq.s32.totalorder %s16, 0
      %p31 = por %p29, %p30
      %p32 = scmp.ne.s32.totalorder %s24, %s26
      %p33 = scmp.eq.s32.totalorder %s21, 1
      %p34 = por %p32, %p33
      %p35 = scmp.ne.s32.totalorder %s26, %s27
      %p36 = scmp.eq.s32.totalorder %s21, 0
      %p37 = por %p35, %p36
      %p38 = scmp.ne.s32.totalorder %s26, %s27
      %p39 = scmp.eq.s32.totalorder %s22, 1
      %p40 = por %p38, %p39
      %p42 = scmp.ne.s32.totalorder %s27, %s41
      %p43 = scmp.eq.s32.totalorder %s22, 0
      %p44 = por %p42, %p43
      %s45 = ssub.s32 %s16, %s23
      %p46 = scmp.eq.s32.totalorder %s45, 0
      %s48 = sadd.s32 %s47, 1
      %s49 = scalar_select %p46, %s47, %s48
      %p52 = pneg %p46
      %p53 = scmp.eq.s32.totalorder %s16, 1
      %p54 = por %p52, %p53
      %p55 = scmp.ne.s32.totalorder %s47, %s50
      %p56 = scmp.eq.s32.totalorder %s16, 0
      %p57 = por %p55, %p56
      %p58 = scmp.ne.s32.totalorder %s47, %s50
      %p59 = scmp.eq.s32.totalorder %s21, 1
      %p60 = por %p58, %p59
      %p61 = scmp.ne.s32.totalorder %s50, %s51
      %p62 = scmp.eq.s32.totalorder %s21, 0
      %p63 = por %p61, %p62
      %p64 = scmp.ne.s32.totalorder %s50, %s51
      %p65 = scmp.eq.s32.totalorder %s22, 1
      %p66 = por %p64, %p65
      %p68 = scmp.ne.s32.totalorder %s51, %s67
      %p69 = scmp.eq.s32.totalorder %s22, 0
      %p70 = por %p68, %p69
      %p71 = scmp.le.s32.totalorder 1, %s16
      %p72 = scmp.lt.s32.totalorder %s16, 3
      %p73 = pnand %p71, %p72
      %p74 = pneg %p73
      // Predicated region
      $region9: #{tpu_custom_call.1} parent=5 // pred_check
        _
      $region10: #{tpu_custom_call.1} parent=5 // pred_check_branch
        %76 = sbr.rel (%p73) target = $region12
      $region11: #{tpu_custom_call.1} parent=5 // pred_region
        %s77 = ssub.s32 %s16, 1
        // Predicated region
        $region13: #{tpu_custom_call.1} parent=11 // pred_check
          %p78 = pneg %p37
        $region14: #{tpu_custom_call.1} parent=11 // pred_check_branch
          %80 = sbr.rel (%p78) target = $region16
        $region15: #{tpu_custom_call.1} parent=11 // pred_region
          %s82 = ssub.s32 16384, 16384
          %83 = vsyncadd [#allocation5], %s82
          %s84 = sshll.u32 [#allocation4], 4
          %s85 = int_to_ptr.vmem [resolvable:$true] %s84
          %90 = dma.hbm_to_vmem [thread:$0]  %s1, 16384, %s85, [#allocation5], 128, 128, 8
        $region16: #{tpu_custom_call.1} parent=11 // pred_fallthru
          _
      $region12: #{tpu_custom_call.1} parent=5 // pred_fallthru
        _
      %p91 = scmp.lt.s32.totalorder %s16, 2
      // Predicated region
      $region17: #{tpu_custom_call.1} parent=5 // pred_check
        %p92 = pneg %p91
      $region18: #{tpu_custom_call.1} parent=5 // pred_check_branch
        %94 = sbr.rel (%p92) target = $region20
      $region19: #{tpu_custom_call.1} parent=5 // pred_region
        _
      $region20: #{tpu_custom_call.1} parent=5 // pred_fallthru
        _
      %p95 = scmp.le.s32.totalorder 1, %s16
      %p96 = scmp.lt.s32.totalorder %s16, 3
      %p97 = pnand %p95, %p96
      %p98 = pneg %p97
      // Predicated region
      $region21: #{tpu_custom_call.1} parent=5 // pred_check
        _
      $region22: #{tpu_custom_call.1} parent=5 // pred_check_branch
        %100 = sbr.rel (%p97) target = $region24
      $region23: #{tpu_custom_call.1} parent=5 // pred_region
        %s101 = ssub.s32 %s16, 1
        // Predicated region
        $region25: #{tpu_custom_call.1} parent=23 // pred_check
          %p102 = pneg %p37
        $region26: #{tpu_custom_call.1} parent=23 // pred_check_branch
          %104 = sbr.rel (%p102) target = $region28
        $region27: #{tpu_custom_call.1} parent=23 // pred_region
          %105 = dma.done [#allocation5], 16384
        $region28: #{tpu_custom_call.1} parent=23 // pred_fallthru
          _
        %p106 = pneg %p37
        %p107 = pneg %p34
        %p108 = pneg %p63
        %p109 = pneg %p60
        %s110 = sand.u32 %s50, 1
        %s111 = scalar_lea.sflag [#allocation6], %s110
        %s112 = sand.u32 %s50, 1
        %s113 = smul.addr %s112, 8
        %s114 = scalar_lea.vmem [#allocation7], %s113
        %s115 = smul.u32 %s21, 64
        %s116 = sld [smem:[#allocation3 + %s115]]
        %s117 = scalar_lea.vmem [#allocation4], %s116
        %v118 = vld [vmem:[%s117] sm:$0x1]
        %v119 = vadd.f32 %v118, 0.0
        %s120 = sadd.s32 %s115, 1
        %s121 = sld [smem:[#allocation3 + %s120]]
        %s122 = scalar_lea.vmem [#allocation4], %s121
        %v123 = vld [vmem:[%s122] sm:$0x1]
        %v124 = vadd.f32 %v119, %v123
        %s125 = sadd.s32 %s115, 2
        %s126 = sld [smem:[#allocation3 + %s125]]
        %s127 = scalar_lea.vmem [#allocation4], %s126
        %v128 = vld [vmem:[%s127] sm:$0x1]
        %v129 = vadd.f32 %v124, %v128
        %s130 = sadd.s32 %s115, 3
        %s131 = sld [smem:[#allocation3 + %s130]]
        %s132 = scalar_lea.vmem [#allocation4], %s131
        %v133 = vld [vmem:[%s132] sm:$0x1]
        %v134 = vadd.f32 %v129, %v133
        %s135 = sadd.s32 %s115, 4
        %s136 = sld [smem:[#allocation3 + %s135]]
        %s137 = scalar_lea.vmem [#allocation4], %s136
        %v138 = vld [vmem:[%s137] sm:$0x1]
        %v139 = vadd.f32 %v134, %v138
        %s140 = sadd.s32 %s115, 5
        %s141 = sld [smem:[#allocation3 + %s140]]
        %s142 = scalar_lea.vmem [#allocation4], %s141
        %v143 = vld [vmem:[%s142] sm:$0x1]
        %v144 = vadd.f32 %v139, %v143
        %s145 = sadd.s32 %s115, 6
        %s146 = sld [smem:[#allocation3 + %s145]]
        %s147 = scalar_lea.vmem [#allocation4], %s146
        %v148 = vld [vmem:[%s147] sm:$0x1]
        %v149 = vadd.f32 %v144, %v148
        %s150 = sadd.s32 %s115, 7
        %s151 = sld [smem:[#allocation3 + %s150]]
        %s152 = scalar_lea.vmem [#allocation4], %s151
        %v153 = vld [vmem:[%s152] sm:$0x1]
        %v154 = vadd.f32 %v149, %v153
        %s155 = sadd.s32 %s115, 8
        %s156 = sld [smem:[#allocation3 + %s155]]
        %s157 = scalar_lea.vmem [#allocation4], %s156
        %v158 = vld [vmem:[%s157] sm:$0x1]
        %v159 = vadd.f32 %v158, 0.0
        %s160 = sadd.s32 %s115, 9
        %s161 = sld [smem:[#allocation3 + %s160]]
        %s162 = scalar_lea.vmem [#allocation4], %s161
        %v163 = vld [vmem:[%s162] sm:$0x1]
        %v164 = vadd.f32 %v159, %v163
        %s165 = sadd.s32 %s115, 10
        %s166 = sld [smem:[#allocation3 + %s165]]
        %s167 = scalar_lea.vmem [#allocation4], %s166
        %v168 = vld [vmem:[%s167] sm:$0x1]
        %v169 = vadd.f32 %v164, %v168
        %s170 = sadd.s32 %s115, 11
        %s171 = sld [smem:[#allocation3 + %s170]]
        %s172 = scalar_lea.vmem [#allocation4], %s171
        %v173 = vld [vmem:[%s172] sm:$0x1]
        %v174 = vadd.f32 %v169, %v173
        %s175 = sadd.s32 %s115, 12
        %s176 = sld [smem:[#allocation3 + %s175]]
        %s177 = scalar_lea.vmem [#allocation4], %s176
        %v178 = vld [vmem:[%s177] sm:$0x1]
        %v179 = vadd.f32 %v174, %v178
        %s180 = sadd.s32 %s115, 13
        %s181 = sld [smem:[#allocation3 + %s180]]
        %s182 = scalar_lea.vmem [#allocation4], %s181
        %v183 = vld [vmem:[%s182] sm:$0x1]
        %v184 = vadd.f32 %v179, %v183
        %s185 = sadd.s32 %s115, 14
        %s186 = sld [smem:[#allocation3 + %s185]]
        %s187 = scalar_lea.vmem [#allocation4], %s186
        %v188 = vld [vmem:[%s187] sm:$0x1]
        %v189 = vadd.f32 %v184, %v188
        %s190 = sadd.s32 %s115, 15
        %s191 = sld [smem:[#allocation3 + %s190]]
        %s192 = scalar_lea.vmem [#allocation4], %s191
        %v193 = vld [vmem:[%s192] sm:$0x1]
        %v194 = vadd.f32 %v189, %v193
        %s195 = sadd.s32 %s115, 16
        %s196 = sld [smem:[#allocation3 + %s195]]
        %s197 = scalar_lea.vmem [#allocation4], %s196
        %v198 = vld [vmem:[%s197] sm:$0x1]
        %v199 = vadd.f32 %v198, 0.0
        %s200 = sadd.s32 %s115, 17
        %s201 = sld [smem:[#allocation3 + %s200]]
        %s202 = scalar_lea.vmem [#allocation4], %s201
        %v203 = vld [vmem:[%s202] sm:$0x1]
        %v204 = vadd.f32 %v199, %v203
        %s205 = sadd.s32 %s115, 18
        %s206 = sld [smem:[#allocation3 + %s205]]
        %s207 = scalar_lea.vmem [#allocation4], %s206
        %v208 = vld [vmem:[%s207] sm:$0x1]
        %v209 = vadd.f32 %v204, %v208
        %s210 = sadd.s32 %s115, 19
        %s211 = sld [smem:[#allocation3 + %s210]]
        %s212 = scalar_lea.vmem [#allocation4], %s211
        %v213 = vld [vmem:[%s212] sm:$0x1]
        %v214 = vadd.f32 %v209, %v213
        %s215 = sadd.s32 %s115, 20
        %s216 = sld [smem:[#allocation3 + %s215]]
        %s217 = scalar_lea.vmem [#allocation4], %s216
        %v218 = vld [vmem:[%s217] sm:$0x1]
        %v219 = vadd.f32 %v214, %v218
        %s220 = sadd.s32 %s115, 21
        %s221 = sld [smem:[#allocation3 + %s220]]
        %s222 = scalar_lea.vmem [#allocation4], %s221
        %v223 = vld [vmem:[%s222] sm:$0x1]
        %v224 = vadd.f32 %v219, %v223
        %s225 = sadd.s32 %s115, 22
        %s226 = sld [smem:[#allocation3 + %s225]]
        %s227 = scalar_lea.vmem [#allocation4], %s226
        %v228 = vld [vmem:[%s227] sm:$0x1]
        %v229 = vadd.f32 %v224, %v228
        %s230 = sadd.s32 %s115, 23
        %s231 = sld [smem:[#allocation3 + %s230]]
        %s232 = scalar_lea.vmem [#allocation4], %s231
        %v233 = vld [vmem:[%s232] sm:$0x1]
        %v234 = vadd.f32 %v229, %v233
        %s235 = sadd.s32 %s115, 24
        %s236 = sld [smem:[#allocation3 + %s235]]
        %s237 = scalar_lea.vmem [#allocation4], %s236
        %v238 = vld [vmem:[%s237] sm:$0x1]
        %v239 = vadd.f32 %v238, 0.0
        %s240 = sadd.s32 %s115, 25
        %s241 = sld [smem:[#allocation3 + %s240]]
        %s242 = scalar_lea.vmem [#allocation4], %s241
        %v243 = vld [vmem:[%s242] sm:$0x1]
        %v244 = vadd.f32 %v239, %v243
        %s245 = sadd.s32 %s115, 26
        %s246 = sld [smem:[#allocation3 + %s245]]
        %s247 = scalar_lea.vmem [#allocation4], %s246
        %v248 = vld [vmem:[%s247] sm:$0x1]
        %v249 = vadd.f32 %v244, %v248
        %s250 = sadd.s32 %s115, 27
        %s251 = sld [smem:[#allocation3 + %s250]]
        %s252 = scalar_lea.vmem [#allocation4], %s251
        %v253 = vld [vmem:[%s252] sm:$0x1]
        %v254 = vadd.f32 %v249, %v253
        %s255 = sadd.s32 %s115, 28
        %s256 = sld [smem:[#allocation3 + %s255]]
        %s257 = scalar_lea.vmem [#allocation4], %s256
        %v258 = vld [vmem:[%s257] sm:$0x1]
        %v259 = vadd.f32 %v254, %v258
        %s260 = sadd.s32 %s115, 29
        %s261 = sld [smem:[#allocation3 + %s260]]
        %s262 = scalar_lea.vmem [#allocation4], %s261
        %v263 = vld [vmem:[%s262] sm:$0x1]
        %v264 = vadd.f32 %v259, %v263
        %s265 = sadd.s32 %s115, 30
        %s266 = sld [smem:[#allocation3 + %s265]]
        %s267 = scalar_lea.vmem [#allocation4], %s266
        %v268 = vld [vmem:[%s267] sm:$0x1]
        %v269 = vadd.f32 %v264, %v268
        %s270 = sadd.s32 %s115, 31
        %s271 = sld [smem:[#allocation3 + %s270]]
        %s272 = scalar_lea.vmem [#allocation4], %s271
        %v273 = vld [vmem:[%s272] sm:$0x1]
        %v274 = vadd.f32 %v269, %v273
        %s275 = sadd.s32 %s115, 32
        %s276 = sld [smem:[#allocation3 + %s275]]
        %s277 = scalar_lea.vmem [#allocation4], %s276
        %v278 = vld [vmem:[%s277] sm:$0x1]
        %v279 = vadd.f32 %v278, 0.0
        %s280 = sadd.s32 %s115, 33
        %s281 = sld [smem:[#allocation3 + %s280]]
        %s282 = scalar_lea.vmem [#allocation4], %s281
        %v283 = vld [vmem:[%s282] sm:$0x1]
        %v284 = vadd.f32 %v279, %v283
        %s285 = sadd.s32 %s115, 34
        %s286 = sld [smem:[#allocation3 + %s285]]
        %s287 = scalar_lea.vmem [#allocation4], %s286
        %v288 = vld [vmem:[%s287] sm:$0x1]
        %v289 = vadd.f32 %v284, %v288
        %s290 = sadd.s32 %s115, 35
        %s291 = sld [smem:[#allocation3 + %s290]]
        %s292 = scalar_lea.vmem [#allocation4], %s291
        %v293 = vld [vmem:[%s292] sm:$0x1]
        %v294 = vadd.f32 %v289, %v293
        %s295 = sadd.s32 %s115, 36
        %s296 = sld [smem:[#allocation3 + %s295]]
        %s297 = scalar_lea.vmem [#allocation4], %s296
        %v298 = vld [vmem:[%s297] sm:$0x1]
        %v299 = vadd.f32 %v294, %v298
        %s300 = sadd.s32 %s115, 37
        %s301 = sld [smem:[#allocation3 + %s300]]
        %s302 = scalar_lea.vmem [#allocation4], %s301
        %v303 = vld [vmem:[%s302] sm:$0x1]
        %v304 = vadd.f32 %v299, %v303
        %s305 = sadd.s32 %s115, 38
        %s306 = sld [smem:[#allocation3 + %s305]]
        %s307 = scalar_lea.vmem [#allocation4], %s306
        %v308 = vld [vmem:[%s307] sm:$0x1]
        %v309 = vadd.f32 %v304, %v308
        %s310 = sadd.s32 %s115, 39
        %s311 = sld [smem:[#allocation3 + %s310]]
        %s312 = scalar_lea.vmem [#allocation4], %s311
        %v313 = vld [vmem:[%s312] sm:$0x1]
        %v314 = vadd.f32 %v309, %v313
        %s315 = sadd.s32 %s115, 40
        %s316 = sld [smem:[#allocation3 + %s315]]
        %s317 = scalar_lea.vmem [#allocation4], %s316
        %v318 = vld [vmem:[%s317] sm:$0x1]
        %v319 = vadd.f32 %v318, 0.0
        %s320 = sadd.s32 %s115, 41
        %s321 = sld [smem:[#allocation3 + %s320]]
        %s322 = scalar_lea.vmem [#allocation4], %s321
        %v323 = vld [vmem:[%s322] sm:$0x1]
        %v324 = vadd.f32 %v319, %v323
        %s325 = sadd.s32 %s115, 42
        %s326 = sld [smem:[#allocation3 + %s325]]
        %s327 = scalar_lea.vmem [#allocation4], %s326
        %v328 = vld [vmem:[%s327] sm:$0x1]
        %v329 = vadd.f32 %v324, %v328
        %s330 = sadd.s32 %s115, 43
        %s331 = sld [smem:[#allocation3 + %s330]]
        %s332 = scalar_lea.vmem [#allocation4], %s331
        %v333 = vld [vmem:[%s332] sm:$0x1]
        %v334 = vadd.f32 %v329, %v333
        %s335 = sadd.s32 %s115, 44
        %s336 = sld [smem:[#allocation3 + %s335]]
        %s337 = scalar_lea.vmem [#allocation4], %s336
        %v338 = vld [vmem:[%s337] sm:$0x1]
        %v339 = vadd.f32 %v334, %v338
        %s340 = sadd.s32 %s115, 45
        %s341 = sld [smem:[#allocation3 + %s340]]
        %s342 = scalar_lea.vmem [#allocation4], %s341
        %v343 = vld [vmem:[%s342] sm:$0x1]
        %v344 = vadd.f32 %v339, %v343
        %s345 = sadd.s32 %s115, 46
        %s346 = sld [smem:[#allocation3 + %s345]]
        %s347 = scalar_lea.vmem [#allocation4], %s346
        %v348 = vld [vmem:[%s347] sm:$0x1]
        %v349 = vadd.f32 %v344, %v348
        %s350 = sadd.s32 %s115, 47
        %s351 = sld [smem:[#allocation3 + %s350]]
        %s352 = scalar_lea.vmem [#allocation4], %s351
        %v353 = vld [vmem:[%s352] sm:$0x1]
        %v354 = vadd.f32 %v349, %v353
        %s355 = sadd.s32 %s115, 48
        %s356 = sld [smem:[#allocation3 + %s355]]
        %s357 = scalar_lea.vmem [#allocation4], %s356
        %v358 = vld [vmem:[%s357] sm:$0x1]
        %v359 = vadd.f32 %v358, 0.0
        %s360 = sadd.s32 %s115, 49
        %s361 = sld [smem:[#allocation3 + %s360]]
        %s362 = scalar_lea.vmem [#allocation4], %s361
        %v363 = vld [vmem:[%s362] sm:$0x1]
        %v364 = vadd.f32 %v359, %v363
        %s365 = sadd.s32 %s115, 50
        %s366 = sld [smem:[#allocation3 + %s365]]
        %s367 = scalar_lea.vmem [#allocation4], %s366
        %v368 = vld [vmem:[%s367] sm:$0x1]
        %v369 = vadd.f32 %v364, %v368
        %s370 = sadd.s32 %s115, 51
        %s371 = sld [smem:[#allocation3 + %s370]]
        %s372 = scalar_lea.vmem [#allocation4], %s371
        %v373 = vld [vmem:[%s372] sm:$0x1]
        %v374 = vadd.f32 %v369, %v373
        %s375 = sadd.s32 %s115, 52
        %s376 = sld [smem:[#allocation3 + %s375]]
        %s377 = scalar_lea.vmem [#allocation4], %s376
        %v378 = vld [vmem:[%s377] sm:$0x1]
        %v379 = vadd.f32 %v374, %v378
        %s380 = sadd.s32 %s115, 53
        %s381 = sld [smem:[#allocation3 + %s380]]
        %s382 = scalar_lea.vmem [#allocation4], %s381
        %v383 = vld [vmem:[%s382] sm:$0x1]
        %v384 = vadd.f32 %v379, %v383
        %s385 = sadd.s32 %s115, 54
        %s386 = sld [smem:[#allocation3 + %s385]]
        %s387 = scalar_lea.vmem [#allocation4], %s386
        %v388 = vld [vmem:[%s387] sm:$0x1]
        %v389 = vadd.f32 %v384, %v388
        %s390 = sadd.s32 %s115, 55
        %s391 = sld [smem:[#allocation3 + %s390]]
        %s392 = scalar_lea.vmem [#allocation4], %s391
        %v393 = vld [vmem:[%s392] sm:$0x1]
        %v394 = vadd.f32 %v389, %v393
        %s395 = sadd.s32 %s115, 56
        %s396 = sld [smem:[#allocation3 + %s395]]
        %s397 = scalar_lea.vmem [#allocation4], %s396
        %v398 = vld [vmem:[%s397] sm:$0x1]
        %v399 = vadd.f32 %v398, 0.0
        %s400 = sadd.s32 %s115, 57
        %s401 = sld [smem:[#allocation3 + %s400]]
        %s402 = scalar_lea.vmem [#allocation4], %s401
        %v403 = vld [vmem:[%s402] sm:$0x1]
        %v404 = vadd.f32 %v399, %v403
        %s405 = sadd.s32 %s115, 58
        %s406 = sld [smem:[#allocation3 + %s405]]
        %s407 = scalar_lea.vmem [#allocation4], %s406
        %v408 = vld [vmem:[%s407] sm:$0x1]
        %v409 = vadd.f32 %v404, %v408
        %s410 = sadd.s32 %s115, 59
        %s411 = sld [smem:[#allocation3 + %s410]]
        %s412 = scalar_lea.vmem [#allocation4], %s411
        %v413 = vld [vmem:[%s412] sm:$0x1]
        %v414 = vadd.f32 %v409, %v413
        %s415 = sadd.s32 %s115, 60
        %s416 = sld [smem:[#allocation3 + %s415]]
        %s417 = scalar_lea.vmem [#allocation4], %s416
        %v418 = vld [vmem:[%s417] sm:$0x1]
        %v419 = vadd.f32 %v414, %v418
        %s420 = sadd.s32 %s115, 61
        %s421 = sld [smem:[#allocation3 + %s420]]
        %s422 = scalar_lea.vmem [#allocation4], %s421
        %v423 = vld [vmem:[%s422] sm:$0x1]
        %v424 = vadd.f32 %v419, %v423
        %s425 = sadd.s32 %s115, 62
        %s426 = sld [smem:[#allocation3 + %s425]]
        %s427 = scalar_lea.vmem [#allocation4], %s426
        %v428 = vld [vmem:[%s427] sm:$0x1]
        %v429 = vadd.f32 %v424, %v428
        %s430 = sadd.s32 %s115, 63
        %s431 = sld [smem:[#allocation3 + %s430]]
        %s432 = scalar_lea.vmem [#allocation4], %s431
        %v433 = vld [vmem:[%s432] sm:$0x1]
        %v434 = vadd.f32 %v429, %v433
        %v436 = vrot.slane %v194, 7
        %v439 = vrot.slane %v234, 6
        %v442 = vrot.slane %v274, 5
        %v445 = vrot.slane %v314, 4
        %v448 = vrot.slane %v354, 3
        %v451 = vrot.slane %v394, 2
        %v454 = vrot.slane %v434, 1
        %vm456 = vcmask 1040384
        %v457 = vsel %vm456, %v154, %v436
        %vm458 = vcmask 1041408
        %v459 = vsel %vm458, %v457, %v439
        %vm460 = vcmask 1042432
        %v461 = vsel %vm460, %v459, %v442
        %vm462 = vcmask 1043456
        %v463 = vsel %vm462, %v461, %v445
        %vm464 = vcmask 1044480
        %v465 = vsel %vm464, %v463, %v448
        %vm466 = vcmask 1045504
        %v467 = vsel %vm466, %v465, %v451
        %vm468 = vcmask 1046528
        %v469 = vsel %vm468, %v467, %v454
        %470 = vst [vmem:[%s114] sm:$0xff] %v469
        %s471 = sand.u32 %s50, 1
        %s472 = scalar_lea.sflag [#allocation6], %s471
        %s473 = sand.u32 %s50, 1
        %s474 = smul.addr %s473, 8
        %s475 = scalar_lea.vmem [#allocation7], %s474
        // Predicated region
        $region29: #{tpu_custom_call.1} parent=23 // pred_check
          %p476 = pneg %p60
        $region30: #{tpu_custom_call.1} parent=23 // pred_check_branch
          %478 = sbr.rel (%p476) target = $region32
        $region31: #{tpu_custom_call.1} parent=23 // pred_region
          %s480 = ssub.s32 128, 128
          %481 = vsyncadd %s472, %s480
          %s482 = smul.addr %s21, 128
          %s483 = scalar_lea.hbm %s2, %s482
          %s485 = sshll.u32 %s475, 4
          %s486 = int_to_ptr.vmem [resolvable:$true] %s485
          %488 = dma.vmem_to_hbm [thread:$0]  %s486, 128, %s483, %s472
        $region32: #{tpu_custom_call.1} parent=23 // pred_fallthru
          _
      $region24: #{tpu_custom_call.1} parent=5 // pred_fallthru
        _
      %p489 = scmp.le.s32.totalorder 2, %s16
      // Predicated region
      $region33: #{tpu_custom_call.1} parent=5 // pred_check
        %p490 = pneg %p489
      $region34: #{tpu_custom_call.1} parent=5 // pred_check_branch
        %492 = sbr.rel (%p490) target = $region36
      $region35: #{tpu_custom_call.1} parent=5 // pred_region
        %s493 = ssub.s32 %s16, 2
        // Predicated region
        $region37: #{tpu_custom_call.1} parent=35 // pred_check
          %p494 = pneg %p66
        $region38: #{tpu_custom_call.1} parent=35 // pred_check_branch
          %496 = sbr.rel (%p494) target = $region40
        $region39: #{tpu_custom_call.1} parent=35 // pred_region
          %s497 = sand.u32 %s51, 1
          %s498 = scalar_lea.sflag [#allocation6], %s497
          %s499 = sand.u32 %s51, 1
          %s500 = smul.addr %s499, 8
          %s501 = scalar_lea.vmem [#allocation7], %s500
          %502 = dma.done %s498, 128
        $region40: #{tpu_custom_call.1} parent=35 // pred_fallthru
          _
      $region36: #{tpu_custom_call.1} parent=5 // pred_fallthru
        _
    $region6: #{tpu_custom_call.1} parent=1 // loop_footer
      %s20 = sadd.s32 1, %s16
    $region7: #{tpu_custom_call.1} parent=1 // loop_footer_branch
      %15 = sbr.rel target = $region3
    $region8: #{tpu_custom_call.1} parent=1 // loop_exit
      _
    %503 = vsyncpa [#allocation5], 1
    %s504 = scalar_lea.sflag [#allocation5], 1
    %505 = vsyncpa %s504, 1
    %506 = vsyncpa [#allocation6], 1
    %s507 = scalar_lea.sflag [#allocation6], 1
    %508 = vsyncpa %s507, 1

</llo_original>
